<compile_context>
chip_gen: v5e
topology: v5e:2x2
jax: 0.10.0
libtpu: 0.0.40
codegen_flags: <defaults>
</compile_context>

<pallas_src>
import math

import jax
import jax.numpy as jnp
from jax.experimental import pallas as pl
from jax.experimental.pallas import tpu as pltpu


# ----------------------------- Pallas kernel --------------------------------
def _patch_embed_kernel(x_ref, w_ref, pe_ref, o_ref):
    # x_ref : (TM, K)     flattened (patch, node) rows for k batches, K=size*N
    # w_ref : (K, N*D)    block-diagonal weight (per-node Linear fused)
    # pe_ref: (TM, N*D)   positional encoding, pre-broadcast over nodes/batches
    # o_ref : (TM, N*D)   lane-dense output rows
    y = jnp.dot(x_ref[...], w_ref[...], preferred_element_type=jnp.float32)
    o_ref[...] = (y + pe_ref[...]).astype(o_ref.dtype)


def _batches_per_tile(B, P, target_rows=2048):
    """Pick k = batches per row-tile so that TM = k*P is a legal sublane block
    (multiple of 8, or the full B*P rows), k divides B, tiles are ~target_rows,
    and we keep >=2 grid steps when B > 1 (feeds both v7x TensorCores)."""
    legal = [k for k in range(1, B + 1)
             if B % k == 0 and ((k * P) % 8 == 0 or k * P == B * P)]
    multi = [k for k in legal if B // k >= 2]
    pool = multi if multi else legal
    for k in sorted(pool):
        if k * P >= target_rows:
            return k
    return max(pool)


# ----------------------------- wrapper (glue) --------------------------------
def patch_embedding_flow(x, weight, pe_table, patch_len, stride):
    """Equivalent of PatchEmbedding_flow.forward.

    x       : (B, T, N, 1) float32
    weight  : (D, L)  == nn.Linear(patch_len, d_model, bias=False).weight
    pe_table: (max_len, D) sinusoidal table
    returns : (B, P, N, D)
    """
    B, T, N, _ = x.shape
    D, L = weight.shape
    assert L == patch_len

    if T == 288:
        size, step = patch_len, stride
    else:
        gap = 288 // T
        assert gap >= 1 and 288 % T == 0, "gap branch requires T to divide 288"
        assert patch_len % gap == 0 and stride % gap == 0, \
            "patch_len and stride must be divisible by gap"
        size, step = patch_len // gap, stride // gap
    P = (T - size) // step + 1
    assert pe_table.shape[0] >= P, "positional-encoding table shorter than P"

    xsq = jnp.squeeze(x, -1)                         # (B, T, N) -- no transpose
    K = size * N

    if step == size:
        # Non-overlapping patches: unfold == pure metadata reshape.
        rows = xsq[:, : P * size, :].reshape(B * P, K)
    else:
        # TODO(synk): overlapping-stride fallback still gathers in XLA; an
        # in-kernel pl.ds-sliced variant would avoid this extra HBM pass.
        idx = jnp.arange(P)[:, None] * step + jnp.arange(size)[None, :]
        rows = xsq[:, idx, :].reshape(B * P, K)      # (B, P, size, N) -> rows

    # Per-node Linear folded into a block-diagonal (size*N, N*D) weight so the
    # MXU emits lane-dense rows directly.  Zero-padding patches to patch_len
    # (gap branch) == slicing the weight to its first `size` input features.
    w_eff = jnp.transpose(weight)[:size]             # (size, D)
    eye = jnp.eye(N, dtype=w_eff.dtype)
    w_big = jnp.einsum("sd,nm->snmd", w_eff, eye).reshape(K, N * D)

    # PE broadcast over nodes -> (P, N*D); tiled over the k batches of a tile.
    pe_big = jnp.broadcast_to(
        pe_table[:P].astype(jnp.float32)[:, None, :], (P, N, D)
    ).reshape(P, N * D)

    k = _batches_per_tile(B, P)
    TM = k * P
    ND = N * D
    M = B * P
    pe_tile = jnp.tile(pe_big, (k, 1))               # (TM, N*D)

    out = pl.pallas_call(
        _patch_embed_kernel,
        out_shape=jax.ShapeDtypeStruct((M, ND), x.dtype),
        grid=(M // TM,),
        in_specs=[
            pl.BlockSpec((TM, K), lambda i: (i, 0)),
            pl.BlockSpec((K, ND), lambda i: (0, 0)),
            pl.BlockSpec((TM, ND), lambda i: (0, 0)),
        ],
        out_specs=pl.BlockSpec((TM, ND), lambda i: (i, 0)),
        compiler_params=pltpu.CompilerParams(
            dimension_semantics=("parallel",)),
    )(rows, w_big, pe_tile)

    # Output permutation already fused; these reshapes are free metadata.
    return out.reshape(B, P, N, D)


# -------------------- deterministic parameter construction -------------------
def make_positional_encoding(d_model, max_len=100):
    position = jnp.arange(max_len, dtype=jnp.float32)[:, None]
    div_term = jnp.exp(
        jnp.arange(0, d_model, 2, dtype=jnp.float32)
        * -(math.log(10000.0) / d_model))
    pe = jnp.zeros((max_len, d_model), dtype=jnp.float32)
    pe = pe.at[:, 0::2].set(jnp.sin(position * div_term))
    pe = pe.at[:, 1::2].set(jnp.cos(position * div_term))
    return pe


def make_linear_weight(key, d_model, patch_len):
    # mimic nn.Linear default: U(-1/sqrt(in), 1/sqrt(in)), bias=False
    bound = 1.0 / math.sqrt(patch_len)
    return jax.random.uniform(
        key, (d_model, patch_len), jnp.float32, minval=-bound, maxval=bound)


# ----------------------------- pure-JAX reference ----------------------------
def _reference(x, weight, pe_table, patch_len, stride):
    B, T, N, _ = x.shape
    xs = jnp.transpose(jnp.squeeze(x, -1), (0, 2, 1))            # (B, N, T)
    if T == 288:
        size, step = patch_len, stride
    else:
        gap = 288 // T
        size, step = patch_len // gap, stride // gap
    P = (T - size) // step + 1
    idx = jnp.arange(P)[:, None] * step + jnp.arange(size)[None, :]
    p = xs[:, :, idx]                                            # (B, N, P, size)
    p = jnp.pad(p, ((0, 0), (0, 0), (0, 0), (0, patch_len - size)))
    y = jnp.einsum("bnpl,dl->bnpd", p, weight) + pe_table[:P][None, None]
    return jnp.transpose(y, (0, 2, 1, 3))                        # (B, P, N, D)


# ----------------------------------- main ------------------------------------
if __name__ == "__main__":
    d_model = 32
    patch_len = 12
    stride = 12
    padding = 0          # unused in forward
    his = 144            # unused in forward

    B, N = 2, 4
    key = jax.random.PRNGKey(0)
    k_w, k_x1, k_x2 = jax.random.split(key, 3)
    weight = make_linear_weight(k_w, d_model, patch_len)
    pe_table = make_positional_encoding(d_model)

    ok = True
    for T, kx in ((144, k_x1), (288, k_x2)):   # gap branch and 288 branch
        x = jax.random.normal(kx, (B, T, N, 1), dtype=jnp.float32)
        out = patch_embedding_flow(x, weight, pe_table, patch_len, stride)
        out = jax.block_until_ready(out)
        ref = _reference(x, weight, pe_table, patch_len, stride)
        P = ref.shape[1]
        ok &= (out.shape == (B, P, N, d_model))
        ok &= bool(jnp.allclose(out, ref, atol=1e-5, rtol=1e-5))

    assert ok
    print("KERNEL_OK")
</pallas_src>

<mosaic_0001>
module attributes {stable_mosaic.version = 11 : i64} {
  func.func @_patch_embed_kernel(%arg0: i32, %arg1: memref<24x24xf32, #tpu.memory_space<vmem>>, %arg2: memref<24x128xf32, #tpu.memory_space<vmem>>, %arg3: memref<24x128xf32, #tpu.memory_space<vmem>>, %arg4: memref<24x128xf32, #tpu.memory_space<vmem>>) attributes {dimension_semantics = [#tpu.dimension_semantics<parallel>], iteration_bounds = array<i64: 2>, scalar_prefetch = 0 : i64, scratch_operands = 0 : i64, tpu.core_type = #tpu.core_type<tc>, window_params = [{transform_indices = @transform_0, window_bounds = array<i64: 24, 24>}, {pipeline_mode = #tpu.pipeline_mode<synchronous>, transform_indices = @transform_1, window_bounds = array<i64: 24, 128>}, {pipeline_mode = #tpu.pipeline_mode<synchronous>, transform_indices = @transform_2, window_bounds = array<i64: 24, 128>}, {transform_indices = @transform_3, window_bounds = array<i64: 24, 128>}]} {
    %c0 = arith.constant 0 : index
    %c0_0 = arith.constant 0 : index
    %0 = vector.load %arg1[%c0, %c0_0] : memref<24x24xf32, #tpu.memory_space<vmem>>, vector<24x24xf32>
    %c0_1 = arith.constant 0 : index
    %c0_2 = arith.constant 0 : index
    %1 = vector.load %arg2[%c0_1, %c0_2] : memref<24x128xf32, #tpu.memory_space<vmem>>, vector<24x128xf32>
    %cst = arith.constant dense<0.000000e+00> : vector<24x128xf32>
    %2 = tpu.matmul %0, %1, %cst {dimension_numbers = #tpu.dot_dimension_numbers<[1], [0], [0], [1], [0, 0, 1, 1], [], []>} : vector<24x24xf32>, vector<24x128xf32>, vector<24x128xf32> -> vector<24x128xf32>
    %c0_3 = arith.constant 0 : index
    %c0_4 = arith.constant 0 : index
    %3 = vector.load %arg3[%c0_3, %c0_4] : memref<24x128xf32, #tpu.memory_space<vmem>>, vector<24x128xf32>
    %4 = arith.addf %2, %3 : vector<24x128xf32>
    %c0_5 = arith.constant 0 : index
    %c0_6 = arith.constant 0 : index
    %5 = vector.load %arg4[%c0_5, %c0_6] : memref<24x128xf32, #tpu.memory_space<vmem>>, vector<24x128xf32>
    tpu.vector_store %arg4[%c0_5, %c0_6], %4 {strides = array<i32>} : memref<24x128xf32, #tpu.memory_space<vmem>>, vector<24x128xf32>,
    return
  }
  func.func @transform_0(%arg0: i32) -> (i32, i32) {
    %c0_i32 = arith.constant 0 : i32
    %c0_i32_0 = arith.constant 0 : i32
    return %arg0, %c0_i32 : i32, i32
  }
  func.func @transform_1(%arg0: i32) -> (i32, i32) {
    %c0_i32 = arith.constant 0 : i32
    %c0_i32_0 = arith.constant 0 : i32
    %c0_i32_1 = arith.constant 0 : i32
    return %c0_i32, %c0_i32_0 : i32, i32
  }
  func.func @transform_2(%arg0: i32) -> (i32, i32) {
    %c0_i32 = arith.constant 0 : i32
    %c0_i32_0 = arith.constant 0 : i32
    %c0_i32_1 = arith.constant 0 : i32
    return %c0_i32, %c0_i32_0 : i32, i32
  }
  func.func @transform_3(%arg0: i32) -> (i32, i32) {
    %c0_i32 = arith.constant 0 : i32
    %c0_i32_0 = arith.constant 0 : i32
    return %arg0, %c0_i32 : i32, i32
  }
}

</mosaic_0001>

<llo_original>
// kernel: tpu_custom_call.1
$region0: #{tpu_custom_call.1}
  #allocation0 [shape = 'u32[]', space=smem, size = 0x4, offset = 0x4, fixed_abs, tag = 'smem constant byte address 0x4 - core index']
  #allocation1 [shape = 'u32[72,128]{1,0:T(1,128)}', space=vmem, size = 0x9000, scoped, tag = 'internal scratch']
  %s0 = inlined_call_operand.vmem [shape: f32[48,24], index: 0, kind: input, shape index: {}]
  %s1 = inlined_call_operand.vmem [shape: f32[24,128], index: 1, kind: input, shape index: {}]
  %s2 = inlined_call_operand.vmem [shape: f32[24,128], index: 2, kind: input, shape index: {}]
  %s3 = inlined_call_operand.hbm [shape: f32[48,128], index: 3, kind: output, shape index: {}]
  %s4 = sld [smem:[#allocation0]]
  $region45: #{tpu_custom_call.1} parent=0
    _
  %s6 = ssub.s32 1, %s4
  %s7 = scalar_select 0, %s6, %s4
  $region1: #{tpu_custom_call.1} parent=0
    #allocation2 [shape = 'u8[24576]{0}', space=vmem, size = 0x6000, scoped, tag = 'output window, operand 0']
    #allocation3 [shape = 's32[2]{0}', space=sflag, size = 0x8, scoped, tag = 'scoped memory for tpu_custom_call.1']
    %8 = vsyncpa [#allocation3], 0
    %s9 = scalar_lea.sflag [#allocation3], 1
    %10 = vsyncpa %s9, 0
    loop: start=0, step=1, limit=4
    $region2: #{tpu_custom_call.1} parent=1 // loop_pre_header
      _
    $region3: #{tpu_custom_call.1} parent=1 // loop_header
      %s12 = sphi 0, %s16
      %p13 = scmp.ge.s32.totalorder %s12, 4
      %s22 = sphi 0, %s24
      %s25 = sphi 0, %s22
      %s26 = sphi 0, %s25
      %s42 = sphi 0, %s26
      %s46 = sphi 0, %s46
      %s48 = sphi 0, %s46
      %s49 = sphi 0, %s48
      %s63 = sphi 0, %s49
      %s67 = sphi 0, %s67
      %s69 = sphi 0, %s67
      %s70 = sphi 0, %s69
      %s84 = sphi 0, %s70
      %s90 = sphi 0, %s92
      %s93 = sphi 0, %s90
      %s94 = sphi 0, %s93
      %s110 = sphi 0, %s94
    $region4: #{tpu_custom_call.1} parent=1 // loop_header_branch
      %15 = sbr.rel (%p13) target = $region8
    $region5: #{tpu_custom_call.1} parent=1 // loop_body
      %s17 = ssub.s32 %s12, 1
      %s18 = ssub.s32 %s12, 2
      %s19 = sadd.s32 %s12, 1
      %s20 = ssub.s32 %s12, %s19
      %p21 = scmp.eq.s32.totalorder %s20, 0
      %s23 = sadd.s32 %s22, 1
      %s24 = scalar_select %p21, %s22, %s23
      %p27 = pneg %p21
      %p28 = scmp.eq.s32.totalorder %s12, 1
      %p29 = por %p27, %p28
      %p30 = scmp.ne.s32.totalorder %s22, %s25
      %p31 = scmp.eq.s32.totalorder %s12, 0
      %p32 = por %p30, %p31
      %p33 = scmp.ne.s32.totalorder %s22, %s25
      %p34 = scmp.eq.s32.totalorder %s17, 1
      %p35 = por %p33, %p34
      %p36 = scmp.ne.s32.totalorder %s25, %s26
      %p37 = scmp.eq.s32.totalorder %s17, 0
      %p38 = por %p36, %p37
      %p39 = scmp.ne.s32.totalorder %s25, %s26
      %p40 = scmp.eq.s32.totalorder %s18, 1
      %p41 = por %p39, %p40
      %p43 = scmp.ne.s32.totalorder %s26, %s42
      %p44 = scmp.eq.s32.totalorder %s18, 0
      %p45 = por %p43, %p44
      %s47 = sadd.s32 %s46, 1
      %p50 = scmp.eq.s32.totalorder %s12, 1
      %p51 = scmp.ne.s32.totalorder %s46, %s48
      %p52 = scmp.eq.s32.totalorder %s12, 0
      %p53 = por %p51, %p52
      %p54 = scmp.ne.s32.totalorder %s46, %s48
      %p55 = scmp.eq.s32.totalorder %s17, 1
      %p56 = por %p54, %p55
      %p57 = scmp.ne.s32.totalorder %s48, %s49
      %p58 = scmp.eq.s32.totalorder %s17, 0
      %p59 = por %p57, %p58
      %p60 = scmp.ne.s32.totalorder %s48, %s49
      %p61 = scmp.eq.s32.totalorder %s18, 1
      %p62 = por %p60, %p61
      %p64 = scmp.ne.s32.totalorder %s49, %s63
      %p65 = scmp.eq.s32.totalorder %s18, 0
      %p66 = por %p64, %p65
      %s68 = sadd.s32 %s67, 1
      %p71 = scmp.eq.s32.totalorder %s12, 1
      %p72 = scmp.ne.s32.totalorder %s67, %s69
      %p73 = scmp.eq.s32.totalorder %s12, 0
      %p74 = por %p72, %p73
      %p75 = scmp.ne.s32.totalorder %s67, %s69
      %p76 = scmp.eq.s32.totalorder %s17, 1
      %p77 = por %p75, %p76
      %p78 = scmp.ne.s32.totalorder %s69, %s70
      %p79 = scmp.eq.s32.totalorder %s17, 0
      %p80 = por %p78, %p79
      %p81 = scmp.ne.s32.totalorder %s69, %s70
      %p82 = scmp.eq.s32.totalorder %s18, 1
      %p83 = por %p81, %p82
      %p85 = scmp.ne.s32.totalorder %s70, %s84
      %p86 = scmp.eq.s32.totalorder %s18, 0
      %p87 = por %p85, %p86
      %s88 = ssub.s32 %s12, %s19
      %p89 = scmp.eq.s32.totalorder %s88, 0
      %s91 = sadd.s32 %s90, 1
      %s92 = scalar_select %p89, %s90, %s91
      %p95 = pneg %p89
      %p96 = scmp.eq.s32.totalorder %s12, 1
      %p97 = por %p95, %p96
      %p98 = scmp.ne.s32.totalorder %s90, %s93
      %p99 = scmp.eq.s32.totalorder %s12, 0
      %p100 = por %p98, %p99
      %p101 = scmp.ne.s32.totalorder %s90, %s93
      %p102 = scmp.eq.s32.totalorder %s17, 1
      %p103 = por %p101, %p102
      %p104 = scmp.ne.s32.totalorder %s93, %s94
      %p105 = scmp.eq.s32.totalorder %s17, 0
      %p106 = por %p104, %p105
      %p107 = scmp.ne.s32.totalorder %s93, %s94
      %p108 = scmp.eq.s32.totalorder %s18, 1
      %p109 = por %p107, %p108
      %p111 = scmp.ne.s32.totalorder %s94, %s110
      %p112 = scmp.eq.s32.totalorder %s18, 0
      %p113 = por %p111, %p112
      %p114 = scmp.le.s32.totalorder 1, %s12
      %p115 = scmp.lt.s32.totalorder %s12, 3
      %p116 = pnand %p114, %p115
      %p117 = pneg %p116
      // Predicated region
      $region9: #{tpu_custom_call.1} parent=5 // pred_check
        _
      $region10: #{tpu_custom_call.1} parent=5 // pred_check_branch
        %119 = sbr.rel (%p116) target = $region12
      $region11: #{tpu_custom_call.1} parent=5 // pred_region
        %s120 = ssub.s32 %s12, 1
        // Predicated region
        $region13: #{tpu_custom_call.1} parent=11 // pred_check
          %p121 = pneg %p59
        $region14: #{tpu_custom_call.1} parent=11 // pred_check_branch
          %123 = sbr.rel (%p121) target = $region16
        $region15: #{tpu_custom_call.1} parent=11 // pred_region
          _
        $region16: #{tpu_custom_call.1} parent=11 // pred_fallthru
          _
        // Predicated region
        $region17: #{tpu_custom_call.1} parent=11 // pred_check
          %p124 = pneg %p80
        $region18: #{tpu_custom_call.1} parent=11 // pred_check_branch
          %126 = sbr.rel (%p124) target = $region20
        $region19: #{tpu_custom_call.1} parent=11 // pred_region
          _
        $region20: #{tpu_custom_call.1} parent=11 // pred_fallthru
          _
      $region12: #{tpu_custom_call.1} parent=5 // pred_fallthru
        _
      %p127 = scmp.lt.s32.totalorder %s12, 2
      // Predicated region
      $region21: #{tpu_custom_call.1} parent=5 // pred_check
        %p128 = pneg %p127
      $region22: #{tpu_custom_call.1} parent=5 // pred_check_branch
        %130 = sbr.rel (%p128) target = $region24
      $region23: #{tpu_custom_call.1} parent=5 // pred_region
        // Predicated region
        $region25: #{tpu_custom_call.1} parent=23 // pred_check
          %p131 = pneg %p32
        $region26: #{tpu_custom_call.1} parent=23 // pred_check_branch
          %133 = sbr.rel (%p131) target = $region28
        $region27: #{tpu_custom_call.1} parent=23 // pred_region
          %s134 = smul.u32 3, %s12
          %p135 = scmp.lt.s32.totalorder %s134, 5
          %s136 = scalar_select %p135, %s134, 5
          %s137 = smul.addr %s136, 8
          %s138 = scalar_lea.vmem %s0, %s137
          %s139 = smul.u32 3, %s12
        $region28: #{tpu_custom_call.1} parent=23 // pred_fallthru
          _
      $region24: #{tpu_custom_call.1} parent=5 // pred_fallthru
        _
      %p140 = scmp.le.s32.totalorder 1, %s12
      %p141 = scmp.lt.s32.totalorder %s12, 3
      %p142 = pnand %p140, %p141
      %p143 = pneg %p142
      // Predicated region
      $region29: #{tpu_custom_call.1} parent=5 // pred_check
        _
      $region30: #{tpu_custom_call.1} parent=5 // pred_check_branch
        %145 = sbr.rel (%p142) target = $region32
      $region31: #{tpu_custom_call.1} parent=5 // pred_region
        %s146 = ssub.s32 %s12, 1
        %s147 = smul.u32 3, %s17
        %p148 = scmp.lt.s32.totalorder %s147, 5
        %s149 = scalar_select %p148, %s147, 5
        %s150 = smul.addr %s149, 8
        %s151 = scalar_lea.vmem %s0, %s150
        %p152 = pneg %p38
        %p153 = pneg %p35
        %p154 = pneg %p59
        %p155 = pneg %p56
        %p156 = pneg %p80
        %p157 = pneg %p77
        %p158 = pneg %p106
        %p159 = pneg %p103
        %s160 = sand.u32 %s93, 1
        %s161 = scalar_lea.sflag [#allocation3], %s160
        %s162 = sand.u32 %s93, 1
        %s163 = smul.addr %s162, 24
        %s164 = scalar_lea.vmem [#allocation2], %s163
        %s165 = smul.u32 3, %s17
        %p166 = scmp.lt.s32.totalorder %s165, 5
        %s167 = scalar_select %p166, %s165, 5
        %s168 = smul.addr %s167, 8
        %s169 = scalar_lea.vmem %s0, %s168
        %s170 = smul.u32 3, %s17
        %s171 = smul.u32 3, %s17
        %v172 = vld [vmem:[%s169] sm:$0xff]
        %v173 = vld [vmem:[%s169 + $0x8] sm:$0xff]
        %v174 = vld [vmem:[%s169 + $0x10] sm:$0xff]
        %v175 = vld [vmem:[%s1] sm:$0xff]
        %v176 = vld [vmem:[%s1 + $0x8] sm:$0xff]
        %v177 = vld [vmem:[%s1 + $0x10] sm:$0xff]
        %v178 = vld [vmem:[%s2] sm:$0xff]
        %v179 = vld [vmem:[%s2 + $0x8] sm:$0xff]
        %v180 = vld [vmem:[%s2 + $0x10] sm:$0xff]
        %vm181 = vcmask 195584
        %v183 = vsel %vm181, %v172, 0
        %v186 = vsel %vm181, %v173, 0
        %v189 = vsel %vm181, %v174, 0
        %191 = vmatpush.msra.mxu0 0.0
        %192 = vmatpush.msra.mxu0 0.0
        %193 = vmatpush.msra.mxu0 0.0
        %194 = vmatpush.msra.mxu0 0.0
        %195 = vmatpush.msra.mxu0 0.0
        %196 = vmatpush.msra.mxu0 0.0
        %197 = vmatpush.msra.mxu0 0.0
        %198 = vmatpush.msra.mxu0 0.0
        %199 = vmatpush.msra.mxu0 0.0
        %200 = vmatpush.msra.mxu0 0.0
        %201 = vmatpush.msra.mxu0 0.0
        %202 = vmatpush.msra.mxu0 0.0
        %203 = vmatpush.msra.mxu0 0.0
        %204 = vmatpush.msra.mxu0 %v177
        %205 = vmatpush.msra.mxu0 %v176
        %206 = vmatpush.msra.mxu0 %v175
        %207 = vmatmul.f32.gmra.mxu0 %v183
        %v208 = vpop.f32.mrf.mxu0
        %v209 = vadd.f32 %v178, %v208
        %210 = vmatmul.f32.gmra.mxu0 %v186
        %v211 = vpop.f32.mrf.mxu0
        %v212 = vadd.f32 %v179, %v211
        %213 = vmatmul.f32.gmra.mxu0 %v189
        %v214 = vpop.f32.mrf.mxu0
        %v215 = vadd.f32 %v180, %v214
        %216 = vdwg.mxu0
        %217 = vst [vmem:[%s164] sm:$0xff] %v209
        %218 = vst [vmem:[%s164 + $0x8] sm:$0xff] %v212
        %219 = vst [vmem:[%s164 + $0x10] sm:$0xff] %v215
        %s220 = sand.u32 %s93, 1
        %s221 = scalar_lea.sflag [#allocation3], %s220
        %s222 = sand.u32 %s93, 1
        %s223 = smul.addr %s222, 24
        %s224 = scalar_lea.vmem [#allocation2], %s223
        // Predicated region
        $region33: #{tpu_custom_call.1} parent=31 // pred_check
          %p225 = pneg %p103
        $region34: #{tpu_custom_call.1} parent=31 // pred_check_branch
          %227 = sbr.rel (%p225) target = $region36
        $region35: #{tpu_custom_call.1} parent=31 // pred_region
          %s228 = smul.u32 3, %s17
          %230 = vsyncadd %s221, 0
          %s231 = smul.addr %s228, 8
          %s232 = scalar_lea.hbm %s3, %s231
          %s233 = sshll.u32 %s224, 4
          %s234 = int_to_ptr.vmem [resolvable:$true] %s233
          %s235 = sshll.u32 %s232, 4
          %s236 = int_to_ptr.hbm [resolvable:$true] %s235
          %241 = dma.vmem_to_hbm [thread:$0]  %s234, 384, %s236, %s221, 128, 128, 8
        $region36: #{tpu_custom_call.1} parent=31 // pred_fallthru
          _
      $region32: #{tpu_custom_call.1} parent=5 // pred_fallthru
        _
      %p242 = scmp.le.s32.totalorder 2, %s12
      // Predicated region
      $region37: #{tpu_custom_call.1} parent=5 // pred_check
        %p243 = pneg %p242
      $region38: #{tpu_custom_call.1} parent=5 // pred_check_branch
        %245 = sbr.rel (%p243) target = $region40
      $region39: #{tpu_custom_call.1} parent=5 // pred_region
        %s246 = ssub.s32 %s12, 2
        // Predicated region
        $region41: #{tpu_custom_call.1} parent=39 // pred_check
          %p247 = pneg %p109
        $region42: #{tpu_custom_call.1} parent=39 // pred_check_branch
          %249 = sbr.rel (%p247) target = $region44
        $region43: #{tpu_custom_call.1} parent=39 // pred_region
          %s250 = sand.u32 %s94, 1
          %s251 = scalar_lea.sflag [#allocation3], %s250
          %s252 = sand.u32 %s94, 1
          %s253 = smul.addr %s252, 24
          %s254 = scalar_lea.vmem [#allocation2], %s253
          %256 = dma.done %s251, 384
        $region44: #{tpu_custom_call.1} parent=39 // pred_fallthru
          _
      $region40: #{tpu_custom_call.1} parent=5 // pred_fallthru
        _
    $region6: #{tpu_custom_call.1} parent=1 // loop_footer
      %s16 = sadd.s32 1, %s12
    $region7: #{tpu_custom_call.1} parent=1 // loop_footer_branch
      %11 = sbr.rel target = $region3
    $region8: #{tpu_custom_call.1} parent=1 // loop_exit
      _
    %257 = vsyncpa [#allocation3], 1
    %s258 = scalar_lea.sflag [#allocation3], 1
    %259 = vsyncpa %s258, 1

</llo_original>
